<compile_context>
chip_gen: v6e
topology: v6e:2x2x1
jax: 0.10.0
libtpu: 0.0.40
codegen_flags: <defaults>
</compile_context>

<pallas_src>
import functools

import jax
import jax.numpy as jnp
from jax.experimental import pallas as pl
from jax.experimental.pallas import tpu as pltpu

EMBED_SIZE = 25
HIDDEN = 50
OUT = 10


def _round_up(x: int, m: int) -> int:
    return ((x + m - 1) // m) * m


def _mlp_kernel(x_ref, w1_ref, b1_ref, w2_ref, b2_ref, o_ref):
    # x_ref : [TB, 25] f32   (natural PyTorch layout, batch on sublanes)
    # w1_ref: [25, 50] bf16  (fc1 weight, pre-transposed, VMEM-resident)
    # b1_ref: [1, 50]  f32
    # w2_ref: [50, 10] bf16  (fc2 weight, pre-transposed, VMEM-resident)
    # b2_ref: [1, 10]  f32
    # o_ref : [TB, 10] f32
    xb = x_ref[...].astype(jnp.bfloat16)
    h = jnp.dot(xb, w1_ref[...], preferred_element_type=jnp.float32)
    h = jnp.maximum(h + b1_ref[...], 0.0)            # fc1 + (dropout=id) + relu
    o = jnp.dot(h.astype(jnp.bfloat16), w2_ref[...],
                preferred_element_type=jnp.float32)
    o = jnp.maximum(o + b2_ref[...], 0.0)            # fc2 + relu + (dropout=id)
    o_ref[...] = o.astype(o_ref.dtype)


def _choose_tile(batch: int, tb_max: int):
    """Pick a batch tile (multiple of 8 rows) that balances work across steps."""
    tb_max = max(8, _round_up(tb_max, 8))
    n_steps = -(-batch // tb_max)                    # ceil
    tb = _round_up(-(-batch // n_steps), 8)          # balanced tile, <= tb_max
    n_steps = -(-batch // tb)                        # ceil over the chosen tile
    return tb, n_steps


@functools.partial(jax.jit, static_argnames=("tb_max",))
def digit_sum_text_phi_forward(x, w1, b1, w2, b2, *, tb_max: int = 4096):
    """x: [B, 25] f32; w1: [50, 25]; b1: [50]; w2: [10, 50]; b2: [10] (PyTorch layouts)."""
    B = x.shape[0]
    TB, n_steps = _choose_tile(B, tb_max)

    # One-time weight prep (tiny tensors, done once at trace; NOT a per-batch HBM pass).
    w1_t = jnp.transpose(w1).astype(jnp.bfloat16)    # [25, 50]
    w2_t = jnp.transpose(w2).astype(jnp.bfloat16)    # [50, 10]
    b1r = b1.reshape(1, HIDDEN).astype(jnp.float32)
    b2r = b2.reshape(1, OUT).astype(jnp.float32)

    flops = 2 * B * (EMBED_SIZE * HIDDEN + HIDDEN * OUT)
    bytes_accessed = (
        4 * B * (EMBED_SIZE + OUT)                           # streamed x / out
        + 2 * (EMBED_SIZE * HIDDEN + HIDDEN * OUT)           # bf16 weights
        + 4 * (HIDDEN + OUT)                                 # biases
    )

    out = pl.pallas_call(
        _mlp_kernel,
        out_shape=jax.ShapeDtypeStruct((B, OUT), jnp.float32),
        grid_spec=pltpu.PrefetchScalarGridSpec(
            num_scalar_prefetch=0,
            grid=(n_steps,),
            in_specs=[
                pl.BlockSpec((TB, EMBED_SIZE), lambda i: (i, 0)),      # x tile (streams)
                pl.BlockSpec((EMBED_SIZE, HIDDEN), lambda i: (0, 0)),  # W1^T (resident)
                pl.BlockSpec((1, HIDDEN), lambda i: (0, 0)),           # b1   (resident)
                pl.BlockSpec((HIDDEN, OUT), lambda i: (0, 0)),         # W2^T (resident)
                pl.BlockSpec((1, OUT), lambda i: (0, 0)),              # b2   (resident)
            ],
            out_specs=pl.BlockSpec((TB, OUT), lambda i: (i, 0)),       # natural output
        ),
        compiler_params=pltpu.CompilerParams(
            dimension_semantics=("parallel",),
            vmem_limit_bytes=32 * 1024 * 1024,
        ),
        cost_estimate=pl.CostEstimate(
            flops=flops, transcendentals=0, bytes_accessed=bytes_accessed
        ),
    )(x, w1_t, b1r, w2_t, b2r)

    return out                                        # [B, 10]


def init_params(key):
    """Deterministic init mimicking PyTorch Linear's U(-1/sqrt(fan_in), 1/sqrt(fan_in))."""
    k1, k2, k3, k4 = jax.random.split(key, 4)
    bound1 = 1.0 / jnp.sqrt(EMBED_SIZE)
    bound2 = 1.0 / jnp.sqrt(HIDDEN)
    w1 = jax.random.uniform(k1, (HIDDEN, EMBED_SIZE), jnp.float32, -bound1, bound1)
    b1 = jax.random.uniform(k2, (HIDDEN,), jnp.float32, -bound1, bound1)
    w2 = jax.random.uniform(k3, (OUT, HIDDEN), jnp.float32, -bound2, bound2)
    b2 = jax.random.uniform(k4, (OUT,), jnp.float32, -bound2, bound2)
    return w1, b1, w2, b2


def reference_forward(x, w1, b1, w2, b2):
    h = jnp.maximum(x @ w1.T + b1, 0.0)
    return jnp.maximum(h @ w2.T + b2, 0.0)


if __name__ == "__main__":
    key = jax.random.PRNGKey(0)
    kx, kx2, kp = jax.random.split(key, 3)

    w1, b1, w2, b2 = init_params(kp)

    # Small demo batch (single block, TB == B == 8).
    batch = 8
    x = jax.random.normal(kx, (batch, EMBED_SIZE), dtype=jnp.float32)
    out = jax.block_until_ready(digit_sum_text_phi_forward(x, w1, b1, w2, b2))
    ref = reference_forward(x, w1, b1, w2, b2)
    assert out.shape == (batch, OUT), out.shape
    # bf16 MXU operands -> relaxed tolerance vs the full-f32 reference.
    assert jnp.allclose(out, ref, atol=2e-2, rtol=2e-2), "mismatch vs reference (single tile)"

    # Ragged batch with a small tile cap to exercise the multi-step grid path
    # and the clipped (unpadded) final block.
    batch2 = 300
    x2 = jax.random.normal(kx2, (batch2, EMBED_SIZE), dtype=jnp.float32)
    out2 = jax.block_until_ready(
        digit_sum_text_phi_forward(x2, w1, b1, w2, b2, tb_max=128)
    )
    ref2 = reference_forward(x2, w1, b1, w2, b2)
    assert out2.shape == (batch2, OUT), out2.shape
    assert jnp.allclose(out2, ref2, atol=2e-2, rtol=2e-2), "mismatch vs reference (multi tile)"

    print("KERNEL_OK")
</pallas_src>

<mosaic_0001>
module attributes {stable_mosaic.version = 11 : i64} {
  func.func @_mlp_kernel(%arg0: i32, %arg1: memref<8x25xf32, #tpu.memory_space<vmem>>, %arg2: memref<25x50xbf16, #tpu.memory_space<vmem>>, %arg3: memref<1x50xf32, #tpu.memory_space<vmem>>, %arg4: memref<50x10xbf16, #tpu.memory_space<vmem>>, %arg5: memref<1x10xf32, #tpu.memory_space<vmem>>, %arg6: memref<8x10xf32, #tpu.memory_space<vmem>>) attributes {dimension_semantics = [#tpu.dimension_semantics<parallel>], iteration_bounds = array<i64: 1>, scalar_prefetch = 0 : i64, scratch_operands = 0 : i64, tpu.core_type = #tpu.core_type<tc>, window_params = [{transform_indices = @transform_0, window_bounds = array<i64: 8, 25>}, {pipeline_mode = #tpu.pipeline_mode<synchronous>, transform_indices = @transform_1, window_bounds = array<i64: 25, 50>}, {pipeline_mode = #tpu.pipeline_mode<synchronous>, transform_indices = @transform_2, window_bounds = array<i64: 1, 50>}, {pipeline_mode = #tpu.pipeline_mode<synchronous>, transform_indices = @transform_3, window_bounds = array<i64: 50, 10>}, {pipeline_mode = #tpu.pipeline_mode<synchronous>, transform_indices = @transform_4, window_bounds = array<i64: 1, 10>}, {transform_indices = @transform_5, window_bounds = array<i64: 8, 10>}]} {
    %c0 = arith.constant 0 : index
    %c0_0 = arith.constant 0 : index
    %0 = vector.load %arg1[%c0, %c0_0] : memref<8x25xf32, #tpu.memory_space<vmem>>, vector<8x25xf32>
    %1 = arith.truncf %0 : vector<8x25xf32> to vector<8x25xbf16>
    %c0_1 = arith.constant 0 : index
    %c0_2 = arith.constant 0 : index
    %2 = vector.load %arg2[%c0_1, %c0_2] : memref<25x50xbf16, #tpu.memory_space<vmem>>, vector<25x50xbf16>
    %cst = arith.constant dense<0.000000e+00> : vector<8x50xf32>
    %3 = tpu.matmul %1, %2, %cst {dimension_numbers = #tpu.dot_dimension_numbers<[1], [0], [0], [1], [0, 0, 1, 1], [], []>} : vector<8x25xbf16>, vector<25x50xbf16>, vector<8x50xf32> -> vector<8x50xf32>
    %c0_3 = arith.constant 0 : index
    %c0_4 = arith.constant 0 : index
    %4 = vector.load %arg3[%c0_3, %c0_4] : memref<1x50xf32, #tpu.memory_space<vmem>>, vector<1x50xf32>
    %5 = vector.broadcast %4 : vector<1x50xf32> to vector<8x50xf32>
    %6 = arith.addf %3, %5 : vector<8x50xf32>
    %cst_5 = arith.constant 0.000000e+00 : f32
    %7 = vector.broadcast %cst_5 : f32 to vector<8x50xf32>
    %8 = arith.maximumf %6, %7 : vector<8x50xf32>
    %9 = arith.truncf %8 : vector<8x50xf32> to vector<8x50xbf16>
    %c0_6 = arith.constant 0 : index
    %c0_7 = arith.constant 0 : index
    %10 = vector.load %arg4[%c0_6, %c0_7] : memref<50x10xbf16, #tpu.memory_space<vmem>>, vector<50x10xbf16>
    %cst_8 = arith.constant dense<0.000000e+00> : vector<8x10xf32>
    %11 = tpu.matmul %9, %10, %cst_8 {dimension_numbers = #tpu.dot_dimension_numbers<[1], [0], [0], [1], [0, 0, 1, 1], [], []>} : vector<8x50xbf16>, vector<50x10xbf16>, vector<8x10xf32> -> vector<8x10xf32>
    %c0_9 = arith.constant 0 : index
    %c0_10 = arith.constant 0 : index
    %12 = vector.load %arg5[%c0_9, %c0_10] : memref<1x10xf32, #tpu.memory_space<vmem>>, vector<1x10xf32>
    %13 = vector.broadcast %12 : vector<1x10xf32> to vector<8x10xf32>
    %14 = arith.addf %11, %13 : vector<8x10xf32>
    %cst_11 = arith.constant 0.000000e+00 : f32
    %15 = vector.broadcast %cst_11 : f32 to vector<8x10xf32>
    %16 = arith.maximumf %14, %15 : vector<8x10xf32>
    %c0_12 = arith.constant 0 : index
    %c0_13 = arith.constant 0 : index
    %17 = vector.load %arg6[%c0_12, %c0_13] : memref<8x10xf32, #tpu.memory_space<vmem>>, vector<8x10xf32>
    tpu.vector_store %arg6[%c0_12, %c0_13], %16 {strides = array<i32>} : memref<8x10xf32, #tpu.memory_space<vmem>>, vector<8x10xf32>,
    return
  }
  func.func @transform_0(%arg0: i32) -> (i32, i32) {
    %c0_i32 = arith.constant 0 : i32
    %c0_i32_0 = arith.constant 0 : i32
    return %arg0, %c0_i32 : i32, i32
  }
  func.func @transform_1(%arg0: i32) -> (i32, i32) {
    %c0_i32 = arith.constant 0 : i32
    %c0_i32_0 = arith.constant 0 : i32
    %c0_i32_1 = arith.constant 0 : i32
    return %c0_i32, %c0_i32_0 : i32, i32
  }
  func.func @transform_2(%arg0: i32) -> (i32, i32) {
    %c0_i32 = arith.constant 0 : i32
    %c0_i32_0 = arith.constant 0 : i32
    %c0_i32_1 = arith.constant 0 : i32
    return %c0_i32, %c0_i32_0 : i32, i32
  }
  func.func @transform_3(%arg0: i32) -> (i32, i32) {
    %c0_i32 = arith.constant 0 : i32
    %c0_i32_0 = arith.constant 0 : i32
    %c0_i32_1 = arith.constant 0 : i32
    return %c0_i32, %c0_i32_0 : i32, i32
  }
  func.func @transform_4(%arg0: i32) -> (i32, i32) {
    %c0_i32 = arith.constant 0 : i32
    %c0_i32_0 = arith.constant 0 : i32
    %c0_i32_1 = arith.constant 0 : i32
    return %c0_i32, %c0_i32_0 : i32, i32
  }
  func.func @transform_5(%arg0: i32) -> (i32, i32) {
    %c0_i32 = arith.constant 0 : i32
    %c0_i32_0 = arith.constant 0 : i32
    return %arg0, %c0_i32 : i32, i32
  }
}

</mosaic_0001>

<llo_original>
// kernel: digit_sum_text_phi_forward.1
$region0: #{digit_sum_text_phi_forward.1}
  #allocation0 [shape = 'u32[]', space=smem, size = 0x4, offset = 0x4, fixed_abs, tag = 'smem constant byte address 0x4 - core index']
  #allocation1 [shape = 'u32[144,128]{1,0:T(1,128)}', space=vmem, size = 0x12000, scoped, tag = 'internal scratch']
  %s0 = inlined_call_operand.vmem [shape: f32[8,25], index: 0, kind: input, shape index: {}]
  %s1 = inlined_call_operand.vmem [shape: bf16[25,50], index: 1, kind: input, shape index: {}]
  %s2 = inlined_call_operand.vmem [shape: f32[1,50], index: 2, kind: input, shape index: {}]
  %s3 = inlined_call_operand.vmem [shape: bf16[50,10], index: 3, kind: input, shape index: {}]
  %s4 = inlined_call_operand.vmem [shape: f32[1,10], index: 4, kind: input, shape index: {}]
  %s5 = inlined_call_operand.hbm [shape: f32[8,10], index: 5, kind: output, shape index: {}]
  %s6 = sld [smem:[#allocation0]]
  $region30: #{digit_sum_text_phi_forward.1} parent=0
    _
  %s8 = ssub.s32 1, %s6
  %s9 = scalar_select 0, %s8, %s6
  $region1: #{digit_sum_text_phi_forward.1} parent=0
    #allocation2 [shape = 'u8[4096]{0}', space=vmem, size = 0x1000, scoped, tag = 'output window, operand 0, single buffered']
    #allocation3 [shape = 's32[1]{0}', space=sflag, size = 0x4, scoped, tag = 'scoped memory for digit_sum_text_phi_forward.1']
    %10 = vsyncpa [#allocation3], 0
    // Predicated region
    $region2: #{digit_sum_text_phi_forward.1} parent=1 // pred_check
      _
    $region3: #{digit_sum_text_phi_forward.1} parent=1 // pred_check_branch
      %12 = sbr.rel (0) target = $region5
    $region4: #{digit_sum_text_phi_forward.1} parent=1 // pred_region
      _
    $region5: #{digit_sum_text_phi_forward.1} parent=1 // pred_fallthru
      _
    // Predicated region
    $region6: #{digit_sum_text_phi_forward.1} parent=1 // pred_check
      _
    $region7: #{digit_sum_text_phi_forward.1} parent=1 // pred_check_branch
      %14 = sbr.rel (0) target = $region9
    $region8: #{digit_sum_text_phi_forward.1} parent=1 // pred_region
      _
    $region9: #{digit_sum_text_phi_forward.1} parent=1 // pred_fallthru
      _
    // Predicated region
    $region10: #{digit_sum_text_phi_forward.1} parent=1 // pred_check
      _
    $region11: #{digit_sum_text_phi_forward.1} parent=1 // pred_check_branch
      %16 = sbr.rel (0) target = $region13
    $region12: #{digit_sum_text_phi_forward.1} parent=1 // pred_region
      _
    $region13: #{digit_sum_text_phi_forward.1} parent=1 // pred_fallthru
      _
    // Predicated region
    $region14: #{digit_sum_text_phi_forward.1} parent=1 // pred_check
      _
    $region15: #{digit_sum_text_phi_forward.1} parent=1 // pred_check_branch
      %18 = sbr.rel (0) target = $region17
    $region16: #{digit_sum_text_phi_forward.1} parent=1 // pred_region
      _
    $region17: #{digit_sum_text_phi_forward.1} parent=1 // pred_fallthru
      _
    // Predicated region
    $region18: #{digit_sum_text_phi_forward.1} parent=1 // pred_check
      _
    $region19: #{digit_sum_text_phi_forward.1} parent=1 // pred_check_branch
      %20 = sbr.rel (0) target = $region21
    $region20: #{digit_sum_text_phi_forward.1} parent=1 // pred_region
      _
    $region21: #{digit_sum_text_phi_forward.1} parent=1 // pred_fallthru
      _
    %v22 = vld [vmem:[%s0] sm:$0xff]
    %v23 = vpack.c.bf16 %v22, %v22
    %v24 = vld [vmem:[%s1] sm:$0xf]
    %v25 = vld [vmem:[%s1 + $0x4] sm:$0xf]
    %v26 = vld [vmem:[%s1 + $0x8] sm:$0xf]
    %v27 = vld [vmem:[%s1 + $0xc] sm:$0x1]
    %v28 = vld [vmem:[%s2] sm:$0x1]
    %v30 = vlaneseq
    %v31 = vshrl.u32 %v30, 7
    %v32 = vsub.s32 0, %v31
    %v33 = vrot.slane %v28, %v32
    %v39 = vunpack.c.l.b16 %v24
    %v40 = vunpack.c.l.b16 %v25
    %v41 = vunpack.c.l.b16 %v26
    %v42 = vunpack.c.l.b16 %v27
    %v43 = vpack.c.b16 %v40, %v39
    %v44 = vpack.c.b16 %v42, %v41
    %vm46 = vcmask 203776
    %v48 = vsel %vm46, %v23, 0
    %vm50 = vcmask 1043456
    %vm51 = vcmask 1044480
    %v52 = vsel %vm50, 4294967295, 65535
    %v53 = vsel %vm51, %v52, 0
    %v55 = vand.u32 %v44, %v53
    %57 = vmatprep.subr.bf16.mxu0 0
    %58 = vmatpush1.bf16.msra.mxu0 0
    %59 = vmatprep.subr.bf16.mxu0 0
    %60 = vmatpush1.bf16.msra.mxu0 0
    %61 = vmatprep.subr.bf16.mxu0 0
    %62 = vmatpush1.bf16.msra.mxu0 0
    %63 = vmatprep.subr.bf16.mxu0 0
    %64 = vmatpush1.bf16.msra.mxu0 0
    %65 = vmatprep.subr.bf16.mxu0 0
    %66 = vmatpush1.bf16.msra.mxu0 0
    %67 = vmatprep.subr.bf16.mxu0 0
    %68 = vmatpush1.bf16.msra.mxu0 0
    %69 = vmatprep.subr.bf16.mxu0 0
    %70 = vmatpush1.bf16.msra.mxu0 %v55
    %71 = vmatprep.subr.bf16.mxu0 0
    %72 = vmatpush1.bf16.msra.mxu0 %v43
    %73 = vmatprep.subr.bf16.mxu0 0
    %74 = vmatpush2.bf16.msra.mxu0 0
    %75 = vmatprep.subr.bf16.mxu0 0
    %76 = vmatpush2.bf16.msra.mxu0 0
    %77 = vmatprep.subr.bf16.mxu0 0
    %78 = vmatpush2.bf16.msra.mxu0 0
    %79 = vmatprep.subr.bf16.mxu0 0
    %80 = vmatpush2.bf16.msra.mxu0 0
    %81 = vmatprep.subr.bf16.mxu0 0
    %82 = vmatpush2.bf16.msra.mxu0 0
    %83 = vmatprep.subr.bf16.mxu0 0
    %84 = vmatpush2.bf16.msra.mxu0 0
    %85 = vmatprep.subr.bf16.mxu0 0
    %86 = vmatpush2.bf16.msra.mxu0 0
    %87 = vmatprep.subr.bf16.mxu0 0
    %88 = vmatpush2.bf16.msra.mxu0 0
    %89 = vmatprep.mubr.bf16.mxu0 0
    %90 = vmatmul.mubr.bf16.gmra.mxu0 %v48
    %v91 = vpop.f32.mrf.mxu0
    %v92 = vadd.f32 %v33, %v91
    %v93 = vpop.f32.mrf.mxu0
    %v94 = vpop.f32.mrf.mxu0
    %v95 = vpop.f32.mrf.mxu0
    %96 = vdwg.mxu0
    %v97 = vmax.f32 %v92, 0.0
    %v98 = vpack.c.bf16 %v97, %v97
    %v99 = vld [vmem:[%s3] sm:$0xf]
    %v100 = vld [vmem:[%s3 + $0x4] sm:$0xf]
    %v101 = vld [vmem:[%s3 + $0x8] sm:$0xf]
    %v102 = vld [vmem:[%s3 + $0xc] sm:$0xf]
    %v103 = vld [vmem:[%s3 + $0x10] sm:$0xf]
    %v104 = vld [vmem:[%s3 + $0x14] sm:$0xf]
    %v105 = vld [vmem:[%s3 + $0x18] sm:$0x1]
    %v106 = vld [vmem:[%s4] sm:$0x1]
    %v108 = vlaneseq
    %v109 = vshrl.u32 %v108, 7
    %v110 = vsub.s32 0, %v109
    %v111 = vrot.slane %v106, %v110
    %v120 = vunpack.c.l.b16 %v99
    %v121 = vunpack.c.l.b16 %v100
    %v122 = vunpack.c.l.b16 %v101
    %v123 = vunpack.c.l.b16 %v102
    %v124 = vunpack.c.l.b16 %v103
    %v125 = vunpack.c.l.b16 %v104
    %v126 = vunpack.c.l.b16 %v105
    %v127 = vpack.c.b16 %v121, %v120
    %v128 = vpack.c.b16 %v123, %v122
    %v129 = vpack.c.b16 %v125, %v124
    %v130 = vpack.c.b16 %v126, %v126
    %vm134 = vcmask 408576
    %v136 = vsel %vm134, %v98, 0
    %vm138 = vcmask 1040384
    %v140 = vsel %vm138, %v130, 0
    %142 = vmatprep.subr.bf16.mxu0 0
    %143 = vmatpush1.bf16.msra.mxu0 0
    %144 = vmatprep.subr.bf16.mxu0 0
    %145 = vmatpush1.bf16.msra.mxu0 0
    %146 = vmatprep.subr.bf16.mxu0 0
    %147 = vmatpush1.bf16.msra.mxu0 0
    %148 = vmatprep.subr.bf16.mxu0 0
    %149 = vmatpush1.bf16.msra.mxu0 0
    %150 = vmatprep.subr.bf16.mxu0 0
    %151 = vmatpush1.bf16.msra.mxu0 %v140
    %152 = vmatprep.subr.bf16.mxu0 0
    %153 = vmatpush1.bf16.msra.mxu0 %v129
    %154 = vmatprep.subr.bf16.mxu0 0
    %155 = vmatpush1.bf16.msra.mxu0 %v128
    %156 = vmatprep.subr.bf16.mxu0 0
    %157 = vmatpush1.bf16.msra.mxu0 %v127
    %158 = vmatprep.subr.bf16.mxu0 0
    %159 = vmatpush2.bf16.msra.mxu0 0
    %160 = vmatprep.subr.bf16.mxu0 0
    %161 = vmatpush2.bf16.msra.mxu0 0
    %162 = vmatprep.subr.bf16.mxu0 0
    %163 = vmatpush2.bf16.msra.mxu0 0
    %164 = vmatprep.subr.bf16.mxu0 0
    %165 = vmatpush2.bf16.msra.mxu0 0
    %166 = vmatprep.subr.bf16.mxu0 0
    %167 = vmatpush2.bf16.msra.mxu0 0
    %168 = vmatprep.subr.bf16.mxu0 0
    %169 = vmatpush2.bf16.msra.mxu0 0
    %170 = vmatprep.subr.bf16.mxu0 0
    %171 = vmatpush2.bf16.msra.mxu0 0
    %172 = vmatprep.subr.bf16.mxu0 0
    %173 = vmatpush2.bf16.msra.mxu0 0
    %174 = vmatprep.mubr.bf16.mxu0 0
    %175 = vmatmul.mubr.bf16.gmra.mxu0 %v136
    %v176 = vpop.f32.mrf.mxu0
    %v177 = vadd.f32 %v111, %v176
    %v178 = vpop.f32.mrf.mxu0
    %v179 = vpop.f32.mrf.mxu0
    %v180 = vpop.f32.mrf.mxu0
    %181 = vdwg.mxu0
    %v182 = vmax.f32 %v177, 0.0
    %vm183 = vcmask 80896
    %184 = vst.msk [vmem:[#allocation2] sm:$0xff] %vm183, %v182
    // Predicated region
    $region22: #{digit_sum_text_phi_forward.1} parent=1 // pred_check
      _
    $region23: #{digit_sum_text_phi_forward.1} parent=1 // pred_check_branch
      %186 = sbr.rel (0) target = $region25
    $region24: #{digit_sum_text_phi_forward.1} parent=1 // pred_region
      %s188 = ssub.s32 128, 128
      %189 = vsyncadd [#allocation3], %s188
      %s191 = sshll.u32 [#allocation2], 4
      %s192 = int_to_ptr.vmem [resolvable:$true] %s191
      %194 = dma.vmem_to_hbm [thread:$0]  %s192, 128, %s5, [#allocation3]
    $region25: #{digit_sum_text_phi_forward.1} parent=1 // pred_fallthru
      _
    // Predicated region
    $region26: #{digit_sum_text_phi_forward.1} parent=1 // pred_check
      _
    $region27: #{digit_sum_text_phi_forward.1} parent=1 // pred_check_branch
      %196 = sbr.rel (0) target = $region29
    $region28: #{digit_sum_text_phi_forward.1} parent=1 // pred_region
      %197 = dma.done [#allocation3], 128
    $region29: #{digit_sum_text_phi_forward.1} parent=1 // pred_fallthru
      _
    %198 = vsyncpa [#allocation3], 1

</llo_original>
